<compile_context>
chip_gen: v7x
topology: tpu7x:2x2x1
jax: 0.10.0
libtpu: 0.0.40
codegen_flags: <defaults>
</compile_context>

<pallas_src>
import functools

import jax
import jax.numpy as jnp
from jax.experimental import pallas as pl
from jax.experimental.pallas import tpu as pltpu


def _linear1_stats_kernel(x_ref, w1_ref, b1_ref, h_ref, stats_ref):
    """h[i] += x[i,k] @ w1[k]; at last k: add bias, emit per-tile sum/sumsq."""
    k = pl.program_id(1)

    @pl.when(k == 0)
    def _init():
        h_ref[...] = jnp.zeros_like(h_ref)

    # bf16 x bf16 operands -> f32 accumulation on the MXU.
    h_ref[...] += jnp.dot(x_ref[...], w1_ref[...],
                          preferred_element_type=jnp.float32)

    @pl.when(k == pl.num_programs(1) - 1)
    def _finalize():
        h = h_ref[...] + b1_ref[...]                      # f32 (TB, hidden)
        h_ref[...] = h
        s = jnp.sum(h, axis=0, keepdims=True)             # (1, hidden)
        ss = jnp.sum(h * h, axis=0, keepdims=True)        # (1, hidden)
        stats_ref[...] = jnp.concatenate([s, ss], axis=0)  # (2, hidden)


def _bn_relu_linear2_kernel(h_ref, ss_ref, w2_ref, b2_ref, o_ref):
    """out = ReLU(h * scale + shift) @ w2 + b2 for one (batch, out) tile."""
    scale = ss_ref[0:1, :]                                # (1, hidden) f32
    shift = ss_ref[1:2, :]
    hn = jnp.maximum(h_ref[...] * scale + shift, 0.0)     # BN + ReLU in f32
    hn = hn.astype(w2_ref.dtype)                          # bf16 operand for MXU
    out = jnp.dot(hn, w2_ref[...], preferred_element_type=jnp.float32)
    o_ref[...] = (out + b2_ref[...]).astype(o_ref.dtype)


def prediction_mlp(x, w1, b1, gamma, beta, w2, b2, *,
                   tb=256, tk=512, tn=256,
                   matmul_dtype=jnp.bfloat16, eps=1e-5):
    B, in_dim = x.shape
    hidden = w1.shape[1]
    out_dim = w2.shape[1]

    # Clamp tiles to the problem and require even tiling (keep last dims
    # multiples of 128 and batch tiles multiples of 8 at real sizes).
    tb = min(tb, B)
    tk = min(tk, in_dim)
    tn = min(tn, out_dim)
    assert B % tb == 0 and in_dim % tk == 0 and out_dim % tn == 0, \
        "batch / in_dim / out_dim must be divisible by the chosen tile sizes"
    nb, nk, nn = B // tb, in_dim // tk, out_dim // tn

    # Cast matmul operands at the boundary (halves weight/activation DMA bytes);
    # biases and all BN math stay f32.
    xc = x.astype(matmul_dtype)
    w1c = w1.astype(matmul_dtype)
    w2c = w2.astype(matmul_dtype)
    b1f = jnp.asarray(b1, jnp.float32).reshape(1, hidden)
    b2f = jnp.asarray(b2, jnp.float32).reshape(1, out_dim)
    msize = xc.dtype.itemsize
    osize = x.dtype.itemsize

    # Per-step VMEM footprint is a few MB for the default tiles, well inside the
    # scoped-VMEM default on v5e/v6e/v7x, so vmem_limit_bytes is left untouched.

    # ---------------- pass 1: Linear(in_dim -> hidden) + batch statistics -----
    h, stats = pl.pallas_call(
        _linear1_stats_kernel,
        out_shape=(jax.ShapeDtypeStruct((B, hidden), jnp.float32),
                   jax.ShapeDtypeStruct((nb, 2, hidden), jnp.float32)),
        grid_spec=pltpu.PrefetchScalarGridSpec(
            num_scalar_prefetch=0,
            grid=(nb, nk),
            in_specs=[
                pl.BlockSpec((tb, tk), lambda i, k: (i, k)),          # x tile
                pl.BlockSpec((tk, hidden), lambda i, k: (k, 0)),      # w1 tile
                pl.BlockSpec((1, hidden), lambda i, k: (0, 0)),       # b1 (resident)
            ],
            out_specs=(
                pl.BlockSpec((tb, hidden), lambda i, k: (i, 0)),      # h (accumulates over k)
                pl.BlockSpec((None, 2, hidden), lambda i, k: (i, 0, 0)),  # per-tile stats
            ),
        ),
        compiler_params=pltpu.CompilerParams(
            dimension_semantics=("parallel", "arbitrary")),
        cost_estimate=pl.CostEstimate(
            flops=2 * B * in_dim * hidden,
            transcendentals=0,
            bytes_accessed=(B * in_dim + in_dim * hidden) * msize
                           + (B * hidden + nb * 2 * hidden + hidden) * 4),
    )(xc, w1c, b1f)

    # ------- full-batch BatchNorm1d stats (training mode: biased var, eps) ----
    psum = jnp.sum(stats[:, 0, :], axis=0)
    psumsq = jnp.sum(stats[:, 1, :], axis=0)
    mean = psum / B
    var = jnp.maximum(psumsq / B - mean * mean, 0.0)
    inv = jax.lax.rsqrt(var + eps)
    scale = jnp.asarray(gamma, jnp.float32).reshape(hidden) * inv
    shift = jnp.asarray(beta, jnp.float32).reshape(hidden) - mean * scale
    scale_shift = jnp.stack([scale, shift], axis=0)       # packed (2, hidden)

    # ---------------- pass 2: BN-apply + ReLU + Linear(hidden -> out_dim) -----
    out = pl.pallas_call(
        _bn_relu_linear2_kernel,
        out_shape=jax.ShapeDtypeStruct((B, out_dim), x.dtype),
        grid_spec=pltpu.PrefetchScalarGridSpec(
            num_scalar_prefetch=0,
            grid=(nb, nn),
            in_specs=[
                pl.BlockSpec((tb, hidden), lambda i, j: (i, 0)),      # h tile
                pl.BlockSpec((2, hidden), lambda i, j: (0, 0)),       # scale/shift (resident)
                pl.BlockSpec((hidden, tn), lambda i, j: (0, j)),      # w2 tile
                pl.BlockSpec((1, tn), lambda i, j: (0, j)),           # b2 tile
            ],
            out_specs=pl.BlockSpec((tb, tn), lambda i, j: (i, j)),
        ),
        compiler_params=pltpu.CompilerParams(
            dimension_semantics=("parallel", "parallel")),
        cost_estimate=pl.CostEstimate(
            flops=2 * B * hidden * out_dim,
            transcendentals=0,
            bytes_accessed=B * hidden * 4 + hidden * out_dim * msize
                           + 2 * hidden * 4 + (out_dim + B * out_dim) * osize),
    )(h, scale_shift, w2c, b2f)

    return out


if __name__ == "__main__":
    # Small, lane-aligned shapes consistent with prediction_MLP
    # (Linear -> BatchNorm1d -> ReLU -> Linear).
    B, in_dim, hidden_dim, out_dim = 64, 256, 128, 256

    key = jax.random.PRNGKey(0)
    k_x, k_w1, k_b1, k_w2, k_b2 = jax.random.split(key, 5)

    x = jax.random.normal(k_x, (B, in_dim), dtype=jnp.float32)
    # Linear weights stored pre-transposed: [in_features, out_features].
    w1 = jax.random.normal(k_w1, (in_dim, hidden_dim), dtype=jnp.float32) * 0.05
    b1 = jax.random.normal(k_b1, (hidden_dim,), dtype=jnp.float32) * 0.05
    gamma = jnp.ones((hidden_dim,), dtype=jnp.float32)    # BN defaults
    beta = jnp.zeros((hidden_dim,), dtype=jnp.float32)
    w2 = jax.random.normal(k_w2, (hidden_dim, out_dim), dtype=jnp.float32) * 0.05
    b2 = jax.random.normal(k_b2, (out_dim,), dtype=jnp.float32) * 0.05

    # Small tiles so the demo exercises a real multi-tile grid (nb=nk=nn=2).
    run = jax.jit(functools.partial(prediction_mlp, tb=32, tk=128, tn=128))
    out = jax.block_until_ready(run(x, w1, b1, gamma, beta, w2, b2))

    # Pure-JAX reference with matching numerics (bf16 MXU operands, f32 accum,
    # training-mode BatchNorm1d: batch stats, biased variance, eps=1e-5).
    bf16 = jnp.bfloat16
    h_ref = jnp.dot(x.astype(bf16), w1.astype(bf16),
                    preferred_element_type=jnp.float32) + b1
    m = h_ref.mean(axis=0, keepdims=True)
    v = ((h_ref - m) ** 2).mean(axis=0, keepdims=True)
    h_ref = (h_ref - m) / jnp.sqrt(v + 1e-5) * gamma + beta
    h_ref = jnp.maximum(h_ref, 0.0)
    ref = jnp.dot(h_ref.astype(bf16), w2.astype(bf16),
                  preferred_element_type=jnp.float32) + b2

    assert out.shape == (B, out_dim) and out.dtype == x.dtype
    err = float(jnp.max(jnp.abs(out - ref)))
    assert jnp.allclose(out, ref, atol=2e-2, rtol=2e-2), f"max abs err = {err}"

    print("KERNEL_OK")
</pallas_src>

<mosaic_0001>
module attributes {stable_mosaic.version = 11 : i64} {
  func.func @_linear1_stats_kernel(%arg0: i32, %arg1: i32, %arg2: memref<32x128xbf16, #tpu.memory_space<vmem>>, %arg3: memref<128x128xbf16, #tpu.memory_space<vmem>>, %arg4: memref<1x128xf32, #tpu.memory_space<vmem>>, %arg5: memref<32x128xf32, #tpu.memory_space<vmem>>, %arg6: memref<1x2x128xf32, #tpu.memory_space<vmem>>) attributes {dimension_semantics = [#tpu.dimension_semantics<parallel>, #tpu.dimension_semantics<arbitrary>], iteration_bounds = array<i64: 2, 2>, scalar_prefetch = 0 : i64, scratch_operands = 0 : i64, tpu.core_type = #tpu.core_type<tc>, window_params = [{transform_indices = @transform_0, window_bounds = array<i64: 32, 128>}, {transform_indices = @transform_1, window_bounds = array<i64: 128, 128>}, {pipeline_mode = #tpu.pipeline_mode<synchronous>, transform_indices = @transform_2, window_bounds = array<i64: 1, 128>}, {transform_indices = @transform_3, window_bounds = array<i64: 32, 128>}, {transform_indices = @transform_4, window_bounds = array<i64: 1, 2, 128>}]} {
    %c0_i32 = arith.constant 0 : i32
    %0 = arith.cmpi eq, %arg1, %c0_i32 : i32
    %1 = arith.extui %0 : i1 to i32
    %c0_i32_0 = arith.constant 0 : i32
    %2 = arith.cmpi ne, %1, %c0_i32_0 : i32
    scf.if %2 {
      %cst_9 = arith.constant 0.000000e+00 : f32
      %12 = vector.broadcast %cst_9 : f32 to vector<32x128xf32>
      %c0_10 = arith.constant 0 : index
      %c0_11 = arith.constant 0 : index
      %13 = vector.load %arg5[%c0_10, %c0_11] : memref<32x128xf32, #tpu.memory_space<vmem>>, vector<32x128xf32>
      tpu.vector_store %arg5[%c0_10, %c0_11], %12 {strides = array<i32>} : memref<32x128xf32, #tpu.memory_space<vmem>>, vector<32x128xf32>,
    } else {
    }
    %c0 = arith.constant 0 : index
    %c0_1 = arith.constant 0 : index
    %3 = vector.load %arg5[%c0, %c0_1] : memref<32x128xf32, #tpu.memory_space<vmem>>, vector<32x128xf32>
    %c0_2 = arith.constant 0 : index
    %c0_3 = arith.constant 0 : index
    %4 = vector.load %arg2[%c0_2, %c0_3] : memref<32x128xbf16, #tpu.memory_space<vmem>>, vector<32x128xbf16>
    %c0_4 = arith.constant 0 : index
    %c0_5 = arith.constant 0 : index
    %5 = vector.load %arg3[%c0_4, %c0_5] : memref<128x128xbf16, #tpu.memory_space<vmem>>, vector<128x128xbf16>
    %cst = arith.constant dense<0.000000e+00> : vector<32x128xf32>
    %6 = tpu.matmul %4, %5, %cst {dimension_numbers = #tpu.dot_dimension_numbers<[1], [0], [0], [1], [0, 0, 1, 1], [], []>} : vector<32x128xbf16>, vector<128x128xbf16>, vector<32x128xf32> -> vector<32x128xf32>
    %7 = arith.addf %3, %6 : vector<32x128xf32>
    %c0_6 = arith.constant 0 : index
    %c0_7 = arith.constant 0 : index
    %8 = vector.load %arg5[%c0_6, %c0_7] : memref<32x128xf32, #tpu.memory_space<vmem>>, vector<32x128xf32>
    tpu.vector_store %arg5[%c0_6, %c0_7], %7 {strides = array<i32>} : memref<32x128xf32, #tpu.memory_space<vmem>>, vector<32x128xf32>,
    %c1_i32 = arith.constant 1 : i32
    %9 = arith.cmpi eq, %arg1, %c1_i32 : i32
    %10 = arith.extui %9 : i1 to i32
    %c0_i32_8 = arith.constant 0 : i32
    %11 = arith.cmpi ne, %10, %c0_i32_8 : i32
    scf.if %11 {
      %c0_9 = arith.constant 0 : index
      %c0_10 = arith.constant 0 : index
      %12 = vector.load %arg5[%c0_9, %c0_10] : memref<32x128xf32, #tpu.memory_space<vmem>>, vector<32x128xf32>
      %c0_11 = arith.constant 0 : index
      %c0_12 = arith.constant 0 : index
      %13 = vector.load %arg4[%c0_11, %c0_12] : memref<1x128xf32, #tpu.memory_space<vmem>>, vector<1x128xf32>
      %14 = vector.broadcast %13 : vector<1x128xf32> to vector<32x128xf32>
      %15 = arith.addf %12, %14 : vector<32x128xf32>
      %c0_13 = arith.constant 0 : index
      %c0_14 = arith.constant 0 : index
      %16 = vector.load %arg5[%c0_13, %c0_14] : memref<32x128xf32, #tpu.memory_space<vmem>>, vector<32x128xf32>
      tpu.vector_store %arg5[%c0_13, %c0_14], %15 {strides = array<i32>} : memref<32x128xf32, #tpu.memory_space<vmem>>, vector<32x128xf32>,
      %cst_15 = arith.constant dense<0.000000e+00> : vector<128xf32>
      %17 = vector.multi_reduction <add>, %15, %cst_15 [0] : vector<32x128xf32> to vector<128xf32>
      %18 = vector.shape_cast %17 : vector<128xf32> to vector<1x128xf32>
      %19 = arith.mulf %15, %15 : vector<32x128xf32>
      %cst_16 = arith.constant dense<0.000000e+00> : vector<128xf32>
      %20 = vector.multi_reduction <add>, %19, %cst_16 [0] : vector<32x128xf32> to vector<128xf32>
      %21 = vector.shape_cast %20 : vector<128xf32> to vector<1x128xf32>
      %22 = tpu.concatenate %18, %21 in 0 : vector<1x128xf32>, vector<1x128xf32> -> vector<2x128xf32>
      %c0_17 = arith.constant 0 : index
      %c0_18 = arith.constant 0 : index
      %c0_19 = arith.constant 0 : index
      %23 = vector.load %arg6[%c0_17, %c0_18, %c0_19] : memref<1x2x128xf32, #tpu.memory_space<vmem>>, vector<1x2x128xf32>
      %24 = vector.shape_cast %23 : vector<1x2x128xf32> to vector<2x128xf32>
      %25 = vector.shape_cast %22 : vector<2x128xf32> to vector<1x2x128xf32>
      tpu.vector_store %arg6[%c0_17, %c0_18, %c0_19], %25 {strides = array<i32>} : memref<1x2x128xf32, #tpu.memory_space<vmem>>, vector<1x2x128xf32>,
    } else {
    }
    return
  }
  func.func @transform_0(%arg0: i32, %arg1: i32) -> (i32, i32) {
    %c0_i32 = arith.constant 0 : i32
    return %arg0, %arg1 : i32, i32
  }
  func.func @transform_1(%arg0: i32, %arg1: i32) -> (i32, i32) {
    %c0_i32 = arith.constant 0 : i32
    %c0_i32_0 = arith.constant 0 : i32
    return %arg1, %c0_i32 : i32, i32
  }
  func.func @transform_2(%arg0: i32, %arg1: i32) -> (i32, i32) {
    %c0_i32 = arith.constant 0 : i32
    %c0_i32_0 = arith.constant 0 : i32
    %c0_i32_1 = arith.constant 0 : i32
    return %c0_i32, %c0_i32_0 : i32, i32
  }
  func.func @transform_3(%arg0: i32, %arg1: i32) -> (i32, i32) {
    %c0_i32 = arith.constant 0 : i32
    %c0_i32_0 = arith.constant 0 : i32
    return %arg0, %c0_i32 : i32, i32
  }
  func.func @transform_4(%arg0: i32, %arg1: i32) -> (i32, i32, i32) {
    %c0_i32 = arith.constant 0 : i32
    %c0_i32_0 = arith.constant 0 : i32
    %c0_i32_1 = arith.constant 0 : i32
    return %arg0, %c0_i32, %c0_i32_0 : i32, i32, i32
  }
}

module attributes {stable_mosaic.version = 11 : i64} {
  func.func @_bn_relu_linear2_kernel(%arg0: i32, %arg1: i32, %arg2: memref<32x128xf32, #tpu.memory_space<vmem>>, %arg3: memref<2x128xf32, #tpu.memory_space<vmem>>, %arg4: memref<128x128xbf16, #tpu.memory_space<vmem>>, %arg5: memref<1x128xf32, #tpu.memory_space<vmem>>, %arg6: memref<32x128xf32, #tpu.memory_space<vmem>>) attributes {dimension_semantics = [#tpu.dimension_semantics<parallel>, #tpu.dimension_semantics<parallel>], iteration_bounds = array<i64: 2, 2>, scalar_prefetch = 0 : i64, scratch_operands = 0 : i64, tpu.core_type = #tpu.core_type<tc>, window_params = [{transform_indices = @transform_0, window_bounds = array<i64: 32, 128>}, {pipeline_mode = #tpu.pipeline_mode<synchronous>, transform_indices = @transform_1, window_bounds = array<i64: 2, 128>}, {transform_indices = @transform_2, window_bounds = array<i64: 128, 128>}, {transform_indices = @transform_3, window_bounds = array<i64: 1, 128>}, {transform_indices = @transform_4, window_bounds = array<i64: 32, 128>}]} {
    %c0 = arith.constant 0 : index
    %c0_0 = arith.constant 0 : index
    %0 = vector.load %arg3[%c0, %c0_0] : memref<2x128xf32, #tpu.memory_space<vmem>>, vector<1x128xf32>
    %c1 = arith.constant 1 : index
    %c0_1 = arith.constant 0 : index
    %1 = vector.load %arg3[%c1, %c0_1] : memref<2x128xf32, #tpu.memory_space<vmem>>, vector<1x128xf32>
    %c0_2 = arith.constant 0 : index
    %c0_3 = arith.constant 0 : index
    %2 = vector.load %arg2[%c0_2, %c0_3] : memref<32x128xf32, #tpu.memory_space<vmem>>, vector<32x128xf32>
    %3 = vector.broadcast %0 : vector<1x128xf32> to vector<32x128xf32>
    %4 = arith.mulf %2, %3 : vector<32x128xf32>
    %5 = vector.broadcast %1 : vector<1x128xf32> to vector<32x128xf32>
    %6 = arith.addf %4, %5 : vector<32x128xf32>
    %cst = arith.constant 0.000000e+00 : f32
    %7 = vector.broadcast %cst : f32 to vector<32x128xf32>
    %8 = arith.maximumf %6, %7 : vector<32x128xf32>
    %9 = arith.truncf %8 : vector<32x128xf32> to vector<32x128xbf16>
    %c0_4 = arith.constant 0 : index
    %c0_5 = arith.constant 0 : index
    %10 = vector.load %arg4[%c0_4, %c0_5] : memref<128x128xbf16, #tpu.memory_space<vmem>>, vector<128x128xbf16>
    %cst_6 = arith.constant dense<0.000000e+00> : vector<32x128xf32>
    %11 = tpu.matmul %9, %10, %cst_6 {dimension_numbers = #tpu.dot_dimension_numbers<[1], [0], [0], [1], [0, 0, 1, 1], [], []>} : vector<32x128xbf16>, vector<128x128xbf16>, vector<32x128xf32> -> vector<32x128xf32>
    %c0_7 = arith.constant 0 : index
    %c0_8 = arith.constant 0 : index
    %12 = vector.load %arg5[%c0_7, %c0_8] : memref<1x128xf32, #tpu.memory_space<vmem>>, vector<1x128xf32>
    %13 = vector.broadcast %12 : vector<1x128xf32> to vector<32x128xf32>
    %14 = arith.addf %11, %13 : vector<32x128xf32>
    %c0_9 = arith.constant 0 : index
    %c0_10 = arith.constant 0 : index
    %15 = vector.load %arg6[%c0_9, %c0_10] : memref<32x128xf32, #tpu.memory_space<vmem>>, vector<32x128xf32>
    tpu.vector_store %arg6[%c0_9, %c0_10], %14 {strides = array<i32>} : memref<32x128xf32, #tpu.memory_space<vmem>>, vector<32x128xf32>,
    return
  }
  func.func @transform_0(%arg0: i32, %arg1: i32) -> (i32, i32) {
    %c0_i32 = arith.constant 0 : i32
    %c0_i32_0 = arith.constant 0 : i32
    return %arg0, %c0_i32 : i32, i32
  }
  func.func @transform_1(%arg0: i32, %arg1: i32) -> (i32, i32) {
    %c0_i32 = arith.constant 0 : i32
    %c0_i32_0 = arith.constant 0 : i32
    %c0_i32_1 = arith.constant 0 : i32
    return %c0_i32, %c0_i32_0 : i32, i32
  }
  func.func @transform_2(%arg0: i32, %arg1: i32) -> (i32, i32) {
    %c0_i32 = arith.constant 0 : i32
    %c0_i32_0 = arith.constant 0 : i32
    return %c0_i32, %arg1 : i32, i32
  }
  func.func @transform_3(%arg0: i32, %arg1: i32) -> (i32, i32) {
    %c0_i32 = arith.constant 0 : i32
    %c0_i32_0 = arith.constant 0 : i32
    return %c0_i32, %arg1 : i32, i32
  }
  func.func @transform_4(%arg0: i32, %arg1: i32) -> (i32, i32) {
    %c0_i32 = arith.constant 0 : i32
    return %arg0, %arg1 : i32, i32
  }
}

</mosaic_0001>

<llo_original>
// kernel: prediction_mlp.2
$region0: #{prediction_mlp.2}
  #allocation0 [shape = 'u32[]', space=smem, size = 0x4, offset = 0x4, fixed_abs, tag = 'smem constant byte address 0x4 - core index']
  #allocation1 [shape = 'u32[144,128]{1,0:T(1,128)}', space=vmem, size = 0x12000, scoped, tag = 'internal scratch']
  %s0 = inlined_call_operand.vmem [shape: bf16[64,256], index: 0, kind: input, shape index: {}]
  %s1 = inlined_call_operand.vmem [shape: bf16[256,128], index: 1, kind: input, shape index: {}]
  %s2 = inlined_call_operand.vmem [shape: f32[1,128], index: 2, kind: input, shape index: {}]
  %s3 = inlined_call_operand.vmem [shape: f32[64,128], index: 3, kind: output, shape index: {0}]
  %s4 = inlined_call_operand.vmem [shape: f32[2,2,128], index: 4, kind: output, shape index: {1}]
  %5 = xla_tuple %s3, %s4
  %s6 = sld [smem:[#allocation0]]
  $region102: #{prediction_mlp.2} parent=0
    _
  %s8 = ssub.s32 1, %s6
  %s9 = scalar_select 0, %s8, %s6
  $region1: #{prediction_mlp.2} parent=0
    #allocation2 [shape = 'u8[16384]{0}', space=vmem, size = 0x4000, scoped, tag = 'input window, operand 0']
    loop: start=0, step=1, limit=6
    $region2: #{prediction_mlp.2} parent=1 // loop_pre_header
      _
    $region3: #{prediction_mlp.2} parent=1 // loop_header
      %s11 = sphi 0, %s15
      %p12 = scmp.ge.s32.totalorder %s11, 6
      %s18 = sphi 0, %s30
      %s19 = sphi 0, %s26
      %s20 = sphi 0, %s18
      %s21 = sphi 0, %s19
      %s22 = sphi 0, %s20
      %s23 = sphi 0, %s21
      %s35 = sphi 0, %s37
      %s38 = sphi 0, %s35
      %s39 = sphi 0, %s38
      %s55 = sphi 0, %s39
      %s61 = sphi 0, %s63
      %s64 = sphi 0, %s61
      %s65 = sphi 0, %s64
      %s81 = sphi 0, %s65
      %s85 = sphi 0, %s85
      %s87 = sphi 0, %s85
      %s88 = sphi 0, %s87
      %s102 = sphi 0, %s88
      %s108 = sphi 0, %s110
      %s111 = sphi 0, %s108
      %s112 = sphi 0, %s111
      %s128 = sphi 0, %s112
      %s134 = sphi 0, %s136
      %s137 = sphi 0, %s134
      %s138 = sphi 0, %s137
      %s154 = sphi 0, %s138
    $region4: #{prediction_mlp.2} parent=1 // loop_header_branch
      %14 = sbr.rel (%p12) target = $region8
    $region5: #{prediction_mlp.2} parent=1 // loop_body
      %s16 = ssub.s32 %s11, 1
      %s17 = ssub.s32 %s11, 2
      %s24 = sadd.s32 1, %s19
      %p25 = scmp.ge.s32.totalorder %s24, 2
      %s26 = scalar_select %p25, 0, %s24
      %s27 = sadd.s32 1, %s18
      %s28 = scalar_select %p25, %s27, %s18
      %p29 = scmp.ge.s32.totalorder %s28, 2
      %s30 = scalar_select %p29, 0, %s28
      %s31 = ssub.s32 %s18, %s30
      %s32 = ssub.s32 %s19, %s26
      %s33 = sor.u32 %s31, %s32
      %p34 = scmp.eq.s32.totalorder %s33, 0
      %s36 = sadd.s32 %s35, 1
      %s37 = scalar_select %p34, %s35, %s36
      %p40 = pneg %p34
      %p41 = scmp.eq.s32.totalorder %s11, 3
      %p42 = por %p40, %p41
      %p43 = scmp.ne.s32.totalorder %s35, %s38
      %p44 = scmp.eq.s32.totalorder %s11, 0
      %p45 = por %p43, %p44
      %p46 = scmp.ne.s32.totalorder %s35, %s38
      %p47 = scmp.eq.s32.totalorder %s16, 3
      %p48 = por %p46, %p47
      %p49 = scmp.ne.s32.totalorder %s38, %s39
      %p50 = scmp.eq.s32.totalorder %s16, 0
      %p51 = por %p49, %p50
      %p52 = scmp.ne.s32.totalorder %s38, %s39
      %p53 = scmp.eq.s32.totalorder %s17, 3
      %p54 = por %p52, %p53
      %p56 = scmp.ne.s32.totalorder %s39, %s55
      %p57 = scmp.eq.s32.totalorder %s17, 0
      %p58 = por %p56, %p57
      %s59 = ssub.s32 %s19, %s26
      %p60 = scmp.eq.s32.totalorder %s59, 0
      %s62 = sadd.s32 %s61, 1
      %s63 = scalar_select %p60, %s61, %s62
      %p66 = pneg %p60
      %p67 = scmp.eq.s32.totalorder %s11, 3
      %p68 = por %p66, %p67
      %p69 = scmp.ne.s32.totalorder %s61, %s64
      %p70 = scmp.eq.s32.totalorder %s11, 0
      %p71 = por %p69, %p70
      %p72 = scmp.ne.s32.totalorder %s61, %s64
      %p73 = scmp.eq.s32.totalorder %s16, 3
      %p74 = por %p72, %p73
      %p75 = scmp.ne.s32.totalorder %s64, %s65
      %p76 = scmp.eq.s32.totalorder %s16, 0
      %p77 = por %p75, %p76
      %p78 = scmp.ne.s32.totalorder %s64, %s65
      %p79 = scmp.eq.s32.totalorder %s17, 3
      %p80 = por %p78, %p79
      %p82 = scmp.ne.s32.totalorder %s65, %s81
      %p83 = scmp.eq.s32.totalorder %s17, 0
      %p84 = por %p82, %p83
      %s86 = sadd.s32 %s85, 1
      %p89 = scmp.eq.s32.totalorder %s11, 3
      %p90 = scmp.ne.s32.totalorder %s85, %s87
      %p91 = scmp.eq.s32.totalorder %s11, 0
      %p92 = por %p90, %p91
      %p93 = scmp.ne.s32.totalorder %s85, %s87
      %p94 = scmp.eq.s32.totalorder %s16, 3
      %p95 = por %p93, %p94
      %p96 = scmp.ne.s32.totalorder %s87, %s88
      %p97 = scmp.eq.s32.totalorder %s16, 0
      %p98 = por %p96, %p97
      %p99 = scmp.ne.s32.totalorder %s87, %s88
      %p100 = scmp.eq.s32.totalorder %s17, 3
      %p101 = por %p99, %p100
      %p103 = scmp.ne.s32.totalorder %s88, %s102
      %p104 = scmp.eq.s32.totalorder %s17, 0
      %p105 = por %p103, %p104
      %s106 = ssub.s32 %s18, %s30
      %p107 = scmp.eq.s32.totalorder %s106, 0
      %s109 = sadd.s32 %s108, 1
      %s110 = scalar_select %p107, %s108, %s109
      %p113 = pneg %p107
      %p114 = scmp.eq.s32.totalorder %s11, 3
      %p115 = por %p113, %p114
      %p116 = scmp.ne.s32.totalorder %s108, %s111
      %p117 = scmp.eq.s32.totalorder %s11, 0
      %p118 = por %p116, %p117
      %p119 = scmp.ne.s32.totalorder %s108, %s111
      %p120 = scmp.eq.s32.totalorder %s16, 3
      %p121 = por %p119, %p120
      %p122 = scmp.ne.s32.totalorder %s111, %s112
      %p123 = scmp.eq.s32.totalorder %s16, 0
      %p124 = por %p122, %p123
      %p125 = scmp.ne.s32.totalorder %s111, %s112
      %p126 = scmp.eq.s32.totalorder %s17, 3
      %p127 = por %p125, %p126
      %p129 = scmp.ne.s32.totalorder %s112, %s128
      %p130 = scmp.eq.s32.totalorder %s17, 0
      %p131 = por %p129, %p130
      %s132 = ssub.s32 %s18, %s30
      %p133 = scmp.eq.s32.totalorder %s132, 0
      %s135 = sadd.s32 %s134, 1
      %s136 = scalar_select %p133, %s134, %s135
      %p139 = pneg %p133
      %p140 = scmp.eq.s32.totalorder %s11, 3
      %p141 = por %p139, %p140
      %p142 = scmp.ne.s32.totalorder %s134, %s137
      %p143 = scmp.eq.s32.totalorder %s11, 0
      %p144 = por %p142, %p143
      %p145 = scmp.ne.s32.totalorder %s134, %s137
      %p146 = scmp.eq.s32.totalorder %s16, 3
      %p147 = por %p145, %p146
      %p148 = scmp.ne.s32.totalorder %s137, %s138
      %p149 = scmp.eq.s32.totalorder %s16, 0
      %p150 = por %p148, %p149
      %p151 = scmp.ne.s32.totalorder %s137, %s138
      %p152 = scmp.eq.s32.totalorder %s17, 3
      %p153 = por %p151, %p152
      %p155 = scmp.ne.s32.totalorder %s138, %s154
      %p156 = scmp.eq.s32.totalorder %s17, 0
      %p157 = por %p155, %p156
      %p158 = scmp.le.s32.totalorder 1, %s11
      %p159 = scmp.lt.s32.totalorder %s11, 5
      %p160 = pnand %p158, %p159
      %p161 = pneg %p160
      // Predicated region
      $region9: #{prediction_mlp.2} parent=5 // pred_check
        _
      $region10: #{prediction_mlp.2} parent=5 // pred_check_branch
        %163 = sbr.rel (%p160) target = $region12
      $region11: #{prediction_mlp.2} parent=5 // pred_region
        %s164 = ssub.s32 %s11, 1
        // Predicated region
        $region13: #{prediction_mlp.2} parent=11 // pred_check
          %p165 = pneg %p98
        $region14: #{prediction_mlp.2} parent=11 // pred_check_branch
          %167 = sbr.rel (%p165) target = $region16
        $region15: #{prediction_mlp.2} parent=11 // pred_region
          _
        $region16: #{prediction_mlp.2} parent=11 // pred_fallthru
          _
      $region12: #{prediction_mlp.2} parent=5 // pred_fallthru
        _
      %p168 = scmp.lt.s32.totalorder %s11, 4
      // Predicated region
      $region17: #{prediction_mlp.2} parent=5 // pred_check
        %p169 = pneg %p168
      $region18: #{prediction_mlp.2} parent=5 // pred_check_branch
        %171 = sbr.rel (%p169) target = $region20
      $region19: #{prediction_mlp.2} parent=5 // pred_region
        // Predicated region
        $region21: #{prediction_mlp.2} parent=19 // pred_check
          %p172 = pneg %p45
        $region22: #{prediction_mlp.2} parent=19 // pred_check_branch
          %174 = sbr.rel (%p172) target = $region24
        $region23: #{prediction_mlp.2} parent=19 // pred_region
          %s175 = sand.u32 %s35, 1
          %s176 = sand.u32 %s35, 1
          %s177 = smul.addr %s176, 16
          %s178 = scalar_lea.vmem [#allocation2], %s177
          %s179 = smul.u32 4, %s18
          %s180 = smul.addr %s179, 2
          %s181 = sadd.s32 %s19, %s180
          %s182 = smul.addr %s181, 4
          %s183 = scalar_lea.vmem %s0, %s182
          // Predicated region
          $region25: #{prediction_mlp.2} parent=23 // pred_check
            _
          $region26: #{prediction_mlp.2} parent=23 // pred_check_branch
            %185 = sbr.rel (0) target = $region28
          $region27: #{prediction_mlp.2} parent=23 // pred_region
            // Predicated region
            $region29: #{prediction_mlp.2} parent=27 // pred_check
              _
            $region30: #{prediction_mlp.2} parent=27 // pred_check_branch
              %187 = sbr.rel target = $region32
            $region31: #{prediction_mlp.2} parent=27 // pred_region
              // Predicated region
              $region44: #{prediction_mlp.2} parent=31 // pred_check
                _
              $region45: #{prediction_mlp.2} parent=31 // pred_check_branch
                %208 = sbr.rel (0) target = $region47
              $region46: #{prediction_mlp.2} parent=31 // pred_region
                loop: start=0, step=1, limit=1
                $region48: #{prediction_mlp.2} parent=46 // loop_pre_header
                  _
                $region49: #{prediction_mlp.2} parent=46 // loop_header
                  %s210 = sphi 0, %s214
                  %p211 = scmp.ge.s32.totalorder %s210, 1
                  %s215 = sphi %s183, %s183
                  %s216 = sphi %s178, %s178
                $region50: #{prediction_mlp.2} parent=46 // loop_header_branch
                  %213 = sbr.rel (%p211) target = $region54
                $region51: #{prediction_mlp.2} parent=46 // loop_body
                  _
                $region52: #{prediction_mlp.2} parent=46 // loop_footer
                  %s214 = sadd.s32 1, %s210
                $region53: #{prediction_mlp.2} parent=46 // loop_footer_branch
                  %209 = sbr.rel target = $region49
                $region54: #{prediction_mlp.2} parent=46 // loop_exit
                  _
                loop: start=0, step=1, limit=1
                $region55: #{prediction_mlp.2} parent=46 // loop_pre_header
                  _
                $region56: #{prediction_mlp.2} parent=46 // loop_header
                  %s219 = sphi 0, %s223
                  %p220 = scmp.ge.s32.totalorder %s219, 1
                  %s224 = sphi %s183, %s183
                  %s225 = sphi %s178, %s178
                $region57: #{prediction_mlp.2} parent=46 // loop_header_branch
                  %222 = sbr.rel (%p220) target = $region61
                $region58: #{prediction_mlp.2} parent=46 // loop_body
                  %v226 = vld [vmem:[%s224] sm:$0xf]
                  %227 = vst [vmem:[%s225] sm:$0xf] %v226
                  %v228 = vld [vmem:[%s224 + $0x8] sm:$0xf]
                  %229 = vst [vmem:[%s225 + $0x4] sm:$0xf] %v228
                  %v230 = vld [vmem:[%s224 + $0x10] sm:$0xf]
                  %231 = vst [vmem:[%s225 + $0x8] sm:$0xf] %v230
                  %v232 = vld [vmem:[%s224 + $0x18] sm:$0xf]
                  %233 = vst [vmem:[%s225 + $0xc] sm:$0xf] %v232
                $region59: #{prediction_mlp.2} parent=46 // loop_footer
                  %s223 = sadd.s32 1, %s219
                $region60: #{prediction_mlp.2} parent=46 // loop_footer_branch
                  %218 = sbr.rel target = $region56
                $region61: #{prediction_mlp.2} parent=46 // loop_exit
                  _
              $region47: #{prediction_mlp.2} parent=31 // pred_fallthru
                _
            $region32: #{prediction_mlp.2} parent=27 // pred_fallthru
              _
            // Predicated region
            $region33: #{prediction_mlp.2} parent=27 // pred_check
              _
            $region34: #{prediction_mlp.2} parent=27 // pred_check_branch
              %189 = sbr.rel (0) target = $region36
            $region35: #{prediction_mlp.2} parent=27 // pred_region
              loop: start=0, step=1, limit=1
              $region37: #{prediction_mlp.2} parent=35 // loop_pre_header
                _
              $region38: #{prediction_mlp.2} parent=35 // loop_header
                %s192 = sphi 0, %s196
                %p193 = scmp.ge.s32.totalorder %s192, 1
                %s197 = sphi %s183, %s183
                %s198 = sphi %s178, %s178
              $region39: #{prediction_mlp.2} parent=35 // loop_header_branch
                %195 = sbr.rel (%p193) target = $region43
              $region40: #{prediction_mlp.2} parent=35 // loop_body
                %v199 = vld [vmem:[%s197] sm:$0xf]
                %200 = vst [vmem:[%s198] sm:$0xf] %v199
                %v201 = vld [vmem:[%s197 + $0x8] sm:$0xf]
                %202 = vst [vmem:[%s198 + $0x4] sm:$0xf] %v201
                %v203 = vld [vmem:[%s197 + $0x10] sm:$0xf]
                %204 = vst [vmem:[%s198 + $0x8] sm:$0xf] %v203
                %v205 = vld [vmem:[%s197 + $0x18] sm:$0xf]
                %206 = vst [vmem:[%s198 + $0xc] sm:$0xf] %v205
              $region41: #{prediction_mlp.2} parent=35 // loop_footer
                %s196 = sadd.s32 1, %s192
              $region42: #{prediction_mlp.2} parent=35 // loop_footer_branch
                %191 = sbr.rel target = $region38
              $region43: #{prediction_mlp.2} parent=35 // loop_exit
                _
            $region36: #{prediction_mlp.2} parent=27 // pred_fallthru
              _
          $region28: #{prediction_mlp.2} parent=23 // pred_fallthru
            _
          %234 = vnop
        $region24: #{prediction_mlp.2} parent=19 // pred_fallthru
          _
        // Predicated region
        $region62: #{prediction_mlp.2} parent=19 // pred_check
          %p235 = pneg %p71
        $region63: #{prediction_mlp.2} parent=19 // pred_check_branch
          %237 = sbr.rel (%p235) target = $region65
        $region64: #{prediction_mlp.2} parent=19 // pred_region
          %s238 = smul.u32 16, %s19
          %p239 = scmp.lt.s32.totalorder %s238, 31
          %s240 = scalar_select %p239, %s238, 31
          %s241 = smul.addr %s240, 4
          %s242 = scalar_lea.vmem %s1, %s241
          %s243 = smul.u32 16, %s19
        $region65: #{prediction_mlp.2} parent=19 // pred_fallthru
          _
      $region20: #{prediction_mlp.2} parent=5 // pred_fallthru
        _
      %p244 = scmp.le.s32.totalorder 1, %s11
      %p245 = scmp.lt.s32.totalorder %s11, 5
      %p246 = pnand %p244, %p245
      %p247 = pneg %p246
      // Predicated region
      $region66: #{prediction_mlp.2} parent=5 // pred_check
        _
      $region67: #{prediction_mlp.2} parent=5 // pred_check_branch
        %249 = sbr.rel (%p246) target = $region69
      $region68: #{prediction_mlp.2} parent=5 // pred_region
        %s250 = ssub.s32 %s11, 1
        %s251 = sand.u32 %s38, 1
        %s252 = sand.u32 %s38, 1
        %s253 = smul.addr %s252, 16
        %s254 = scalar_lea.vmem [#allocation2], %s253
        // Predicated region
        $region70: #{prediction_mlp.2} parent=68 // pred_check
          %p255 = pneg %p51
        $region71: #{prediction_mlp.2} parent=68 // pred_check_branch
          %257 = sbr.rel (%p255) target = $region73
        $region72: #{prediction_mlp.2} parent=68 // pred_region
          _
        $region73: #{prediction_mlp.2} parent=68 // pred_fallthru
          _
        %s258 = sand.u32 %s38, 1
        %s259 = sand.u32 %s38, 1
        %s260 = smul.addr %s259, 16
        %s261 = scalar_lea.vmem [#allocation2], %s260
        %p262 = pneg %p51
        %p263 = pneg %p48
        %s264 = smul.u32 16, %s21
        %p265 = scmp.lt.s32.totalorder %s264, 31
        %s266 = scalar_select %p265, %s264, 31
        %s267 = smul.addr %s266, 4
        %s268 = scalar_lea.vmem %s1, %s267
        %p269 = pneg %p77
        %p270 = pneg %p74
        %p271 = pneg %p98
        %p272 = pneg %p95
        %p273 = pneg %p124
        %p274 = pneg %p121
        %s275 = smul.u32 4, %s20
        %p276 = scmp.lt.s32.totalorder %s275, 7
        %s277 = scalar_select %p276, %s275, 7
        %s278 = smul.addr %s277, 8
        %s279 = scalar_lea.vmem %s3, %s278
        %p280 = pneg %p150
        %p281 = pneg %p147
        %p282 = scmp.lt.s32.totalorder %s20, 1
        %s283 = scalar_select %p282, %s20, 1
        %s284 = smul.addr %s283, 2
        %s285 = scalar_lea.vmem %s4, %s284
        %s286 = smul.u32 4, %s20
        %s287 = smul.u32 16, %s21
        %p288 = scmp.lt.s32.totalorder %s287, 31
        %s289 = scalar_select %p288, %s287, 31
        %s290 = smul.addr %s289, 4
        %s291 = scalar_lea.vmem %s1, %s290
        %s292 = smul.u32 16, %s21
        %s293 = smul.u32 4, %s20
        %p294 = scmp.lt.s32.totalorder %s293, 7
        %s295 = scalar_select %p294, %s293, 7
        %s296 = smul.addr %s295, 8
        %s297 = scalar_lea.vmem %s3, %s296
        %s298 = smul.u32 4, %s20
        %p299 = scmp.lt.s32.totalorder %s20, 1
        %s300 = scalar_select %p299, %s20, 1
        %s301 = smul.addr %s300, 2
        %s302 = scalar_lea.vmem %s4, %s301
        %p304 = scmp.eq.s32.totalorder %s21, 0
        // Predicated region
        $region74: #{prediction_mlp.2} parent=68 // pred_check
          %p305 = pneg %p304
        $region75: #{prediction_mlp.2} parent=68 // pred_check_branch
          %307 = sbr.rel (%p305) target = $region77
        $region76: #{prediction_mlp.2} parent=68 // pred_region
          %308 = vst [vmem:[%s297] sm:$0xff] 0.0
          %309 = vst [vmem:[%s297 + $0x8] sm:$0xff] 0.0
          %310 = vst [vmem:[%s297 + $0x10] sm:$0xff] 0.0
          %311 = vst [vmem:[%s297 + $0x18] sm:$0xff] 0.0
        $region77: #{prediction_mlp.2} parent=68 // pred_fallthru
          _
        %v312 = vld [vmem:[%s297] sm:$0xff]
        %v313 = vld [vmem:[%s297 + $0x8] sm:$0xff]
        %v314 = vld [vmem:[%s297 + $0x10] sm:$0xff]
        %v315 = vld [vmem:[%s297 + $0x18] sm:$0xff]
        %v316 = vld [vmem:[%s254] sm:$0xf]
        %v317 = vld [vmem:[%s254 + $0x4] sm:$0xf]
        %v318 = vld [vmem:[%s254 + $0x8] sm:$0xf]
        %v319 = vld [vmem:[%s254 + $0xc] sm:$0xf]
        %v320 = vld [vmem:[%s291] sm:$0xf]
        %v321 = vld [vmem:[%s291 + $0x4] sm:$0xf]
        %v322 = vld [vmem:[%s291 + $0x8] sm:$0xf]
        %v323 = vld [vmem:[%s291 + $0xc] sm:$0xf]
        %v324 = vld [vmem:[%s291 + $0x10] sm:$0xf]
        %v325 = vld [vmem:[%s291 + $0x14] sm:$0xf]
        %v326 = vld [vmem:[%s291 + $0x18] sm:$0xf]
        %v327 = vld [vmem:[%s291 + $0x1c] sm:$0xf]
        %v328 = vld [vmem:[%s291 + $0x20] sm:$0xf]
        %v329 = vld [vmem:[%s291 + $0x24] sm:$0xf]
        %v330 = vld [vmem:[%s291 + $0x28] sm:$0xf]
        %v331 = vld [vmem:[%s291 + $0x2c] sm:$0xf]
        %v332 = vld [vmem:[%s291 + $0x30] sm:$0xf]
        %v333 = vld [vmem:[%s291 + $0x34] sm:$0xf]
        %v334 = vld [vmem:[%s291 + $0x38] sm:$0xf]
        %v335 = vld [vmem:[%s291 + $0x3c] sm:$0xf]
        %v340 = vunpack.c.l.b16 %v316
        %v341 = vunpack.c.l.b16 %v317
        %v342 = vunpack.c.l.b16 %v318
        %v343 = vunpack.c.l.b16 %v319
        %v344 = vpack.c.b16 %v341, %v340
        %v345 = vpack.c.b16 %v343, %v342
        %v364 = vunpack.c.l.b16 %v320
        %v365 = vunpack.c.l.b16 %v321
        %v366 = vunpack.c.l.b16 %v322
        %v367 = vunpack.c.l.b16 %v323
        %v368 = vunpack.c.l.b16 %v324
        %v369 = vunpack.c.l.b16 %v325
        %v370 = vunpack.c.l.b16 %v326
        %v371 = vunpack.c.l.b16 %v327
        %v372 = vunpack.c.l.b16 %v328
        %v373 = vunpack.c.l.b16 %v329
        %v374 = vunpack.c.l.b16 %v330
        %v375 = vunpack.c.l.b16 %v331
        %v376 = vunpack.c.l.b16 %v332
        %v377 = vunpack.c.l.b16 %v333
        %v378 = vunpack.c.l.b16 %v334
        %v379 = vunpack.c.l.b16 %v335
        %v380 = vpack.c.b16 %v365, %v364
        %v381 = vpack.c.b16 %v367, %v366
        %v382 = vpack.c.b16 %v369, %v368
        %v383 = vpack.c.b16 %v371, %v370
        %v384 = vpack.c.b16 %v373, %v372
        %v385 = vpack.c.b16 %v375, %v374
        %v386 = vpack.c.b16 %v377, %v376
        %v387 = vpack.c.b16 %v379, %v378
        %396 = vmatprep.subr.bf16.mxu0 0
        %397 = vmatpush1.bf16.msra.mxu0 %v380
        %398 = vmatprep.subr.bf16.mxu0 0
        %399 = vmatpush1.bf16.msra.mxu0 %v381
        %400 = vmatprep.subr.bf16.mxu0 0
        %401 = vmatpush1.bf16.msra.mxu0 %v382
        %402 = vmatprep.subr.bf16.mxu0 0
        %403 = vmatpush1.bf16.msra.mxu0 %v383
        %404 = vmatprep.subr.bf16.mxu0 0
        %405 = vmatpush1.bf16.msra.mxu0 %v384
        %406 = vmatprep.subr.bf16.mxu0 0
        %407 = vmatpush1.bf16.msra.mxu0 %v385
        %408 = vmatprep.subr.bf16.mxu0 0
        %409 = vmatpush1.bf16.msra.mxu0 %v386
        %410 = vmatprep.subr.bf16.mxu0 0
        %411 = vmatpush1.bf16.msra.mxu0 %v387
        %412 = vmatprep.subr.bf16.mxu0 0
        %413 = vmatpush1.bf16.msra.mxu0 0
        %414 = vmatprep.subr.bf16.mxu0 0
        %415 = vmatpush1.bf16.msra.mxu0 0
        %416 = vmatprep.subr.bf16.mxu0 0
        %417 = vmatpush1.bf16.msra.mxu0 0
        %418 = vmatprep.subr.bf16.mxu0 0
        %419 = vmatpush1.bf16.msra.mxu0 0
        %420 = vmatprep.subr.bf16.mxu0 0
        %421 = vmatpush1.bf16.msra.mxu0 0
        %422 = vmatprep.subr.bf16.mxu0 0
        %423 = vmatpush1.bf16.msra.mxu0 0
        %424 = vmatprep.subr.bf16.mxu0 0
        %425 = vmatpush1.bf16.msra.mxu0 0
        %426 = vmatprep.subr.bf16.mxu0 0
        %427 = vmatpush1.bf16.msra.mxu0 0
        %428 = vmatprep.mubr.bf16.mxu0 0
        %429 = vmatmul.mubr.bf16.gmra.mrb[0].mxu0 %v344
        %v430 = vpop.f32.mrb[0].mxu0
        %v431 = vadd.f32 0.0, %v430
        %v432 = vpop.f32.mrb[0].mxu0
        %v433 = vpop.f32.mrb[0].mxu0
        %v434 = vadd.f32 0.0, %v433
        %v435 = vpop.f32.mrb[0].mxu0
        %436 = vmatprep.mubr.bf16.mxu0 0
        %437 = vmatmul.mubr.bf16.gmra.mrb[0].mxu0 %v345
        %v438 = vpop.f32.mrb[0].mxu0
        %v439 = vadd.f32 0.0, %v438
        %v440 = vpop.f32.mrb[0].mxu0
        %v441 = vpop.f32.mrb[0].mxu0
        %v442 = vadd.f32 0.0, %v441
        %v443 = vpop.f32.mrb[0].mxu0
        %444 = vdwg.mxu0
        %v445 = vadd.f32 %v312, %v431
        %v446 = vadd.f32 %v313, %v434
        %v447 = vadd.f32 %v314, %v439
        %v448 = vadd.f32 %v315, %v442
        %449 = vst [vmem:[%s297] sm:$0xff] %v445
        %450 = vst [vmem:[%s297 + $0x8] sm:$0xff] %v446
        %451 = vst [vmem:[%s297 + $0x10] sm:$0xff] %v447
        %452 = vst [vmem:[%s297 + $0x18] sm:$0xff] %v448
        %p453 = scmp.eq.s32.totalorder %s21, 1
        // Predicated region
        $region78: #{prediction_mlp.2} parent=68 // pred_check
          %p454 = pneg %p453
        $region79: #{prediction_mlp.2} parent=68 // pred_check_branch
          %456 = sbr.rel (%p454) target = $region81
        $region80: #{prediction_mlp.2} parent=68 // pred_region
          %v457 = vld [vmem:[%s297] sm:$0xff]
          %v458 = vld [vmem:[%s297 + $0x8] sm:$0xff]
          %v459 = vld [vmem:[%s297 + $0x10] sm:$0xff]
          %v460 = vld [vmem:[%s297 + $0x18] sm:$0xff]
          %v461 = vld [vmem:[%s2] sm:$0x1]
          %v463 = vlaneseq
          %v464 = vshrl.u32 %v463, 7
          %v465 = vsub.s32 0, %v464
          %v466 = vrot.slane %v461, %v465
          %v468 = vadd.f32 %v457, %v466
          %v469 = vadd.f32 %v458, %v466
          %v470 = vadd.f32 %v459, %v466
          %v471 = vadd.f32 %v460, %v466
          %472 = vst [vmem:[%s297] sm:$0xff] %v468
          %473 = vst [vmem:[%s297 + $0x8] sm:$0xff] %v469
          %474 = vst [vmem:[%s297 + $0x10] sm:$0xff] %v470
          %475 = vst [vmem:[%s297 + $0x18] sm:$0xff] %v471
          %v476 = vadd.f32 %v468, %v469
          %v477 = vadd.f32 %v476, %v470
          %v478 = vadd.f32 %v477, %v471
          %v479 = vrot.slane %v478, 4
          %v480 = vadd.f32 %v478, %v479
          %v481 = vrot.slane %v480, 2
          %v482 = vadd.f32 %v480, %v481
          %v483 = vrot.slane %v482, 1
          %v484 = vadd.f32 %v482, %v483
          %v485 = vmul.f32 %v468, %v468
          %v486 = vmul.f32 %v469, %v469
          %v487 = vmul.f32 %v470, %v470
          %v488 = vmul.f32 %v471, %v471
          %v489 = vadd.f32 %v485, %v486
          %v490 = vadd.f32 %v489, %v487
          %v491 = vadd.f32 %v490, %v488
          %v492 = vrot.slane %v491, 4
          %v493 = vadd.f32 %v491, %v492
          %v494 = vrot.slane %v493, 2
          %v495 = vadd.f32 %v493, %v494
          %v496 = vrot.slane %v495, 1
          %v497 = vadd.f32 %v495, %v496
          %vm498 = vcmask 1040384
          %v499 = vsel %vm498, %v484, %v497
          %500 = vst [vmem:[%s302] sm:$0x3] %v499
        $region81: #{prediction_mlp.2} parent=68 // pred_fallthru
          _
        %s501 = smul.u32 4, %s20
        %p502 = scmp.lt.s32.totalorder %s501, 7
        %s503 = scalar_select %p502, %s501, 7
        %s504 = smul.addr %s503, 8
        %s505 = scalar_lea.vmem %s3, %s504
        %p506 = scmp.lt.s32.totalorder %s20, 1
        %s507 = scalar_select %p506, %s20, 1
        %s508 = smul.addr %s507, 2
        %s509 = scalar_lea.vmem %s4, %s508
        // Predicated region
        $region82: #{prediction_mlp.2} parent=68 // pred_check
          %p510 = pneg %p121
        $region83: #{prediction_mlp.2} parent=68 // pred_check_branch
          %512 = sbr.rel (%p510) target = $region85
        $region84: #{prediction_mlp.2} parent=68 // pred_region
          %s513 = smul.u32 4, %s20
        $region85: #{prediction_mlp.2} parent=68 // pred_fallthru
          _
        // Predicated region
        $region86: #{prediction_mlp.2} parent=68 // pred_check
          %p514 = pneg %p147
        $region87: #{prediction_mlp.2} parent=68 // pred_check_branch
          %516 = sbr.rel (%p514) target = $region89
        $region88: #{prediction_mlp.2} parent=68 // pred_region
          _
        $region89: #{prediction_mlp.2} parent=68 // pred_fallthru
          _
      $region69: #{prediction_mlp.2} parent=5 // pred_fallthru
        _
      %p517 = scmp.le.s32.totalorder 2, %s11
      // Predicated region
      $region90: #{prediction_mlp.2} parent=5 // pred_check
        %p518 = pneg %p517
      $region91: #{prediction_mlp.2} parent=5 // pred_check_branch
        %520 = sbr.rel (%p518) target = $region93
      $region92: #{prediction_mlp.2} parent=5 // pred_region
        %s521 = ssub.s32 %s11, 2
        // Predicated region
        $region94: #{prediction_mlp.2} parent=92 // pred_check
          %p522 = pneg %p127
        $region95: #{prediction_mlp.2} parent=92 // pred_check_branch
          %524 = sbr.rel (%p522) target = $region97
        $region96: #{prediction_mlp.2} parent=92 // pred_region
          %s525 = smul.u32 4, %s22
          %p526 = scmp.lt.s32.totalorder %s525, 7
          %s527 = scalar_select %p526, %s525, 7
          %s528 = smul.addr %s527, 8
          %s529 = scalar_lea.vmem %s3, %s528
        $region97: #{prediction_mlp.2} parent=92 // pred_fallthru
          _
        // Predicated region
        $region98: #{prediction_mlp.2} parent=92 // pred_check
          %p530 = pneg %p153
        $region99: #{prediction_mlp.2} parent=92 // pred_check_branch
          %532 = sbr.rel (%p530) target = $region101
        $region100: #{prediction_mlp.2} parent=92 // pred_region
          %p533 = scmp.lt.s32.totalorder %s22, 1
          %s534 = scalar_select %p533, %s22, 1
          %s535 = smul.addr %s534, 2
          %s536 = scalar_lea.vmem %s4, %s535
        $region101: #{prediction_mlp.2} parent=92 // pred_fallthru
          _
      $region93: #{prediction_mlp.2} parent=5 // pred_fallthru
        _
    $region6: #{prediction_mlp.2} parent=1 // loop_footer
      %s15 = sadd.s32 1, %s11
    $region7: #{prediction_mlp.2} parent=1 // loop_footer_branch
      %10 = sbr.rel target = $region3
    $region8: #{prediction_mlp.2} parent=1 // loop_exit
      _

// kernel: prediction_mlp.3
$region0: #{prediction_mlp.3}
  #allocation0 [shape = 'u32[]', space=smem, size = 0x4, offset = 0x4, fixed_abs, tag = 'smem constant byte address 0x4 - core index']
  #allocation1 [shape = 'u32[144,128]{1,0:T(1,128)}', space=vmem, size = 0x12000, scoped, tag = 'internal scratch']
  %s0 = inlined_call_operand.vmem [shape: f32[64,128], index: 0, kind: input, shape index: {}]
  %s1 = inlined_call_operand.vmem [shape: f32[2,128], index: 1, kind: input, shape index: {}]
  %s2 = inlined_call_operand.vmem [shape: bf16[128,256], index: 2, kind: input, shape index: {}]
  %s3 = inlined_call_operand.vmem [shape: f32[1,256], index: 3, kind: input, shape index: {}]
  %s4 = inlined_call_operand.hbm [shape: f32[64,256], index: 4, kind: output, shape index: {}]
  %s5 = sld [smem:[#allocation0]]
  $region90: #{prediction_mlp.3} parent=0
    _
  %s7 = ssub.s32 1, %s5
  %s8 = scalar_select 0, %s7, %s5
  $region1: #{prediction_mlp.3} parent=0
    #allocation2 [shape = 'u8[65536]{0}', space=vmem, size = 0x10000, scoped, tag = 'input window, operand 2']
    #allocation3 [shape = 'u8[32768]{0}', space=vmem, size = 0x8000, scoped, tag = 'output window, operand 0']
    #allocation4 [shape = 's32[2]{0}', space=sflag, size = 0x8, scoped, tag = 'scoped memory for prediction_mlp.3']
    %9 = vsyncpa [#allocation4], 0
    %s10 = scalar_lea.sflag [#allocation4], 1
    %11 = vsyncpa %s10, 0
    loop: start=0, step=1, limit=6
    $region2: #{prediction_mlp.3} parent=1 // loop_pre_header
      _
    $region3: #{prediction_mlp.3} parent=1 // loop_header
      %s13 = sphi 0, %s17
      %p14 = scmp.ge.s32.totalorder %s13, 6
      %s20 = sphi 0, %s32
      %s21 = sphi 0, %s28
      %s22 = sphi 0, %s20
      %s23 = sphi 0, %s21
      %s24 = sphi 0, %s22
      %s25 = sphi 0, %s23
      %s35 = sphi 0, %s37
      %s38 = sphi 0, %s35
      %s39 = sphi 0, %s38
      %s55 = sphi 0, %s39
      %s59 = sphi 0, %s59
      %s61 = sphi 0, %s59
      %s62 = sphi 0, %s61
      %s76 = sphi 0, %s62
      %s82 = sphi 0, %s84
      %s85 = sphi 0, %s82
      %s86 = sphi 0, %s85
      %s102 = sphi 0, %s86
      %s108 = sphi 0, %s110
      %s111 = sphi 0, %s108
      %s112 = sphi 0, %s111
      %s128 = sphi 0, %s112
      %s136 = sphi 0, %s138
      %s139 = sphi 0, %s136
      %s140 = sphi 0, %s139
      %s156 = sphi 0, %s140
    $region4: #{prediction_mlp.3} parent=1 // loop_header_branch
      %16 = sbr.rel (%p14) target = $region8
    $region5: #{prediction_mlp.3} parent=1 // loop_body
      %s18 = ssub.s32 %s13, 1
      %s19 = ssub.s32 %s13, 2
      %s26 = sadd.s32 1, %s21
      %p27 = scmp.ge.s32.totalorder %s26, 2
      %s28 = scalar_select %p27, 0, %s26
      %s29 = sadd.s32 1, %s20
      %s30 = scalar_select %p27, %s29, %s20
      %p31 = scmp.ge.s32.totalorder %s30, 2
      %s32 = scalar_select %p31, 0, %s30
      %s33 = ssub.s32 %s20, %s32
      %p34 = scmp.eq.s32.totalorder %s33, 0
      %s36 = sadd.s32 %s35, 1
      %s37 = scalar_select %p34, %s35, %s36
      %p40 = pneg %p34
      %p41 = scmp.eq.s32.totalorder %s13, 3
      %p42 = por %p40, %p41
      %p43 = scmp.ne.s32.totalorder %s35, %s38
      %p44 = scmp.eq.s32.totalorder %s13, 0
      %p45 = por %p43, %p44
      %p46 = scmp.ne.s32.totalorder %s35, %s38
      %p47 = scmp.eq.s32.totalorder %s18, 3
      %p48 = por %p46, %p47
      %p49 = scmp.ne.s32.totalorder %s38, %s39
      %p50 = scmp.eq.s32.totalorder %s18, 0
      %p51 = por %p49, %p50
      %p52 = scmp.ne.s32.totalorder %s38, %s39
      %p53 = scmp.eq.s32.totalorder %s19, 3
      %p54 = por %p52, %p53
      %p56 = scmp.ne.s32.totalorder %s39, %s55
      %p57 = scmp.eq.s32.totalorder %s19, 0
      %p58 = por %p56, %p57
      %s60 = sadd.s32 %s59, 1
      %p63 = scmp.eq.s32.totalorder %s13, 3
      %p64 = scmp.ne.s32.totalorder %s59, %s61
      %p65 = scmp.eq.s32.totalorder %s13, 0
      %p66 = por %p64, %p65
      %p67 = scmp.ne.s32.totalorder %s59, %s61
      %p68 = scmp.eq.s32.totalorder %s18, 3
      %p69 = por %p67, %p68
      %p70 = scmp.ne.s32.totalorder %s61, %s62
      %p71 = scmp.eq.s32.totalorder %s18, 0
      %p72 = por %p70, %p71
      %p73 = scmp.ne.s32.totalorder %s61, %s62
      %p74 = scmp.eq.s32.totalorder %s19, 3
      %p75 = por %p73, %p74
      %p77 = scmp.ne.s32.totalorder %s62, %s76
      %p78 = scmp.eq.s32.totalorder %s19, 0
      %p79 = por %p77, %p78
      %s80 = ssub.s32 %s21, %s28
      %p81 = scmp.eq.s32.totalorder %s80, 0
      %s83 = sadd.s32 %s82, 1
      %s84 = scalar_select %p81, %s82, %s83
      %p87 = pneg %p81
      %p88 = scmp.eq.s32.totalorder %s13, 3
      %p89 = por %p87, %p88
      %p90 = scmp.ne.s32.totalorder %s82, %s85
      %p91 = scmp.eq.s32.totalorder %s13, 0
      %p92 = por %p90, %p91
      %p93 = scmp.ne.s32.totalorder %s82, %s85
      %p94 = scmp.eq.s32.totalorder %s18, 3
      %p95 = por %p93, %p94
      %p96 = scmp.ne.s32.totalorder %s85, %s86
      %p97 = scmp.eq.s32.totalorder %s18, 0
      %p98 = por %p96, %p97
      %p99 = scmp.ne.s32.totalorder %s85, %s86
      %p100 = scmp.eq.s32.totalorder %s19, 3
      %p101 = por %p99, %p100
      %p103 = scmp.ne.s32.totalorder %s86, %s102
      %p104 = scmp.eq.s32.totalorder %s19, 0
      %p105 = por %p103, %p104
      %s106 = ssub.s32 %s21, %s28
      %p107 = scmp.eq.s32.totalorder %s106, 0
      %s109 = sadd.s32 %s108, 1
      %s110 = scalar_select %p107, %s108, %s109
      %p113 = pneg %p107
      %p114 = scmp.eq.s32.totalorder %s13, 3
      %p115 = por %p113, %p114
      %p116 = scmp.ne.s32.totalorder %s108, %s111
      %p117 = scmp.eq.s32.totalorder %s13, 0
      %p118 = por %p116, %p117
      %p119 = scmp.ne.s32.totalorder %s108, %s111
      %p120 = scmp.eq.s32.totalorder %s18, 3
      %p121 = por %p119, %p120
      %p122 = scmp.ne.s32.totalorder %s111, %s112
      %p123 = scmp.eq.s32.totalorder %s18, 0
      %p124 = por %p122, %p123
      %p125 = scmp.ne.s32.totalorder %s111, %s112
      %p126 = scmp.eq.s32.totalorder %s19, 3
      %p127 = por %p125, %p126
      %p129 = scmp.ne.s32.totalorder %s112, %s128
      %p130 = scmp.eq.s32.totalorder %s19, 0
      %p131 = por %p129, %p130
      %s132 = ssub.s32 %s20, %s32
      %s133 = ssub.s32 %s21, %s28
      %s134 = sor.u32 %s132, %s133
      %p135 = scmp.eq.s32.totalorder %s134, 0
      %s137 = sadd.s32 %s136, 1
      %s138 = scalar_select %p135, %s136, %s137
      %p141 = pneg %p135
      %p142 = scmp.eq.s32.totalorder %s13, 3
      %p143 = por %p141, %p142
      %p144 = scmp.ne.s32.totalorder %s136, %s139
      %p145 = scmp.eq.s32.totalorder %s13, 0
      %p146 = por %p144, %p145
      %p147 = scmp.ne.s32.totalorder %s136, %s139
      %p148 = scmp.eq.s32.totalorder %s18, 3
      %p149 = por %p147, %p148
      %p150 = scmp.ne.s32.totalorder %s139, %s140
      %p151 = scmp.eq.s32.totalorder %s18, 0
      %p152 = por %p150, %p151
      %p153 = scmp.ne.s32.totalorder %s139, %s140
      %p154 = scmp.eq.s32.totalorder %s19, 3
      %p155 = por %p153, %p154
      %p157 = scmp.ne.s32.totalorder %s140, %s156
      %p158 = scmp.eq.s32.totalorder %s19, 0
      %p159 = por %p157, %p158
      %p160 = scmp.le.s32.totalorder 1, %s13
      %p161 = scmp.lt.s32.totalorder %s13, 5
      %p162 = pnand %p160, %p161
      %p163 = pneg %p162
      // Predicated region
      $region9: #{prediction_mlp.3} parent=5 // pred_check
        _
      $region10: #{prediction_mlp.3} parent=5 // pred_check_branch
        %165 = sbr.rel (%p162) target = $region12
      $region11: #{prediction_mlp.3} parent=5 // pred_region
        %s166 = ssub.s32 %s13, 1
        // Predicated region
        $region13: #{prediction_mlp.3} parent=11 // pred_check
          %p167 = pneg %p72
        $region14: #{prediction_mlp.3} parent=11 // pred_check_branch
          %169 = sbr.rel (%p167) target = $region16
        $region15: #{prediction_mlp.3} parent=11 // pred_region
          _
        $region16: #{prediction_mlp.3} parent=11 // pred_fallthru
          _
      $region12: #{prediction_mlp.3} parent=5 // pred_fallthru
        _
      %p170 = scmp.lt.s32.totalorder %s13, 4
      // Predicated region
      $region17: #{prediction_mlp.3} parent=5 // pred_check
        %p171 = pneg %p170
      $region18: #{prediction_mlp.3} parent=5 // pred_check_branch
        %173 = sbr.rel (%p171) target = $region20
      $region19: #{prediction_mlp.3} parent=5 // pred_region
        // Predicated region
        $region21: #{prediction_mlp.3} parent=19 // pred_check
          %p174 = pneg %p45
        $region22: #{prediction_mlp.3} parent=19 // pred_check_branch
          %176 = sbr.rel (%p174) target = $region24
        $region23: #{prediction_mlp.3} parent=19 // pred_region
          %s177 = smul.u32 4, %s20
          %p178 = scmp.lt.s32.totalorder %s177, 7
          %s179 = scalar_select %p178, %s177, 7
          %s180 = smul.addr %s179, 8
          %s181 = scalar_lea.vmem %s0, %s180
          %s182 = smul.u32 4, %s20
        $region24: #{prediction_mlp.3} parent=19 // pred_fallthru
          _
        // Predicated region
        $region25: #{prediction_mlp.3} parent=19 // pred_check
          %p183 = pneg %p92
        $region26: #{prediction_mlp.3} parent=19 // pred_check_branch
          %185 = sbr.rel (%p183) target = $region28
        $region27: #{prediction_mlp.3} parent=19 // pred_region
          %s186 = sand.u32 %s82, 1
          %s187 = sand.u32 %s82, 1
          %s188 = smul.addr %s187, 64
          %s189 = scalar_lea.vmem [#allocation2], %s188
          %s190 = smul.addr %s21, 4
          %s191 = scalar_lea.vmem %s2, %s190
          // Predicated region
          $region29: #{prediction_mlp.3} parent=27 // pred_check
            _
          $region30: #{prediction_mlp.3} parent=27 // pred_check_branch
            %193 = sbr.rel (0) target = $region32
          $region31: #{prediction_mlp.3} parent=27 // pred_region
            // Predicated region
            $region33: #{prediction_mlp.3} parent=31 // pred_check
              _
            $region34: #{prediction_mlp.3} parent=31 // pred_check_branch
              %195 = sbr.rel target = $region36
            $region35: #{prediction_mlp.3} parent=31 // pred_region
              // Predicated region
              $region48: #{prediction_mlp.3} parent=35 // pred_check
                _
              $region49: #{prediction_mlp.3} parent=35 // pred_check_branch
                %240 = sbr.rel (0) target = $region51
              $region50: #{prediction_mlp.3} parent=35 // pred_region
                loop: start=0, step=1, limit=1
                $region52: #{prediction_mlp.3} parent=50 // loop_pre_header
                  _
                $region53: #{prediction_mlp.3} parent=50 // loop_header
                  %s242 = sphi 0, %s246
                  %p243 = scmp.ge.s32.totalorder %s242, 1
                  %s247 = sphi %s191, %s191
                  %s248 = sphi %s189, %s189
                $region54: #{prediction_mlp.3} parent=50 // loop_header_branch
                  %245 = sbr.rel (%p243) target = $region58
                $region55: #{prediction_mlp.3} parent=50 // loop_body
                  _
                $region56: #{prediction_mlp.3} parent=50 // loop_footer
                  %s246 = sadd.s32 1, %s242
                $region57: #{prediction_mlp.3} parent=50 // loop_footer_branch
                  %241 = sbr.rel target = $region53
                $region58: #{prediction_mlp.3} parent=50 // loop_exit
                  _
                loop: start=0, step=1, limit=1
                $region59: #{prediction_mlp.3} parent=50 // loop_pre_header
                  _
                $region60: #{prediction_mlp.3} parent=50 // loop_header
                  %s251 = sphi 0, %s255
                  %p252 = scmp.ge.s32.totalorder %s251, 1
                  %s256 = sphi %s191, %s191
                  %s257 = sphi %s189, %s189
                $region61: #{prediction_mlp.3} parent=50 // loop_header_branch
                  %254 = sbr.rel (%p252) target = $region65
                $region62: #{prediction_mlp.3} parent=50 // loop_body
                  %v258 = vld [vmem:[%s256] sm:$0xf]
                  %259 = vst [vmem:[%s257] sm:$0xf] %v258
                  %v260 = vld [vmem:[%s256 + $0x8] sm:$0xf]
                  %261 = vst [vmem:[%s257 + $0x4] sm:$0xf] %v260
                  %v262 = vld [vmem:[%s256 + $0x10] sm:$0xf]
                  %263 = vst [vmem:[%s257 + $0x8] sm:$0xf] %v262
                  %v264 = vld [vmem:[%s256 + $0x18] sm:$0xf]
                  %265 = vst [vmem:[%s257 + $0xc] sm:$0xf] %v264
                  %v266 = vld [vmem:[%s256 + $0x20] sm:$0xf]
                  %267 = vst [vmem:[%s257 + $0x10] sm:$0xf] %v266
                  %v268 = vld [vmem:[%s256 + $0x28] sm:$0xf]
                  %269 = vst [vmem:[%s257 + $0x14] sm:$0xf] %v268
                  %v270 = vld [vmem:[%s256 + $0x30] sm:$0xf]
                  %271 = vst [vmem:[%s257 + $0x18] sm:$0xf] %v270
                  %v272 = vld [vmem:[%s256 + $0x38] sm:$0xf]
                  %273 = vst [vmem:[%s257 + $0x1c] sm:$0xf] %v272
                  %v274 = vld [vmem:[%s256 + $0x40] sm:$0xf]
                  %275 = vst [vmem:[%s257 + $0x20] sm:$0xf] %v274
                  %v276 = vld [vmem:[%s256 + $0x48] sm:$0xf]
                  %277 = vst [vmem:[%s257 + $0x24] sm:$0xf] %v276
                  %v278 = vld [vmem:[%s256 + $0x50] sm:$0xf]
                  %279 = vst [vmem:[%s257 + $0x28] sm:$0xf] %v278
                  %v280 = vld [vmem:[%s256 + $0x58] sm:$0xf]
                  %281 = vst [vmem:[%s257 + $0x2c] sm:$0xf] %v280
                  %v282 = vld [vmem:[%s256 + $0x60] sm:$0xf]
                  %283 = vst [vmem:[%s257 + $0x30] sm:$0xf] %v282
                  %v284 = vld [vmem:[%s256 + $0x68] sm:$0xf]
                  %285 = vst [vmem:[%s257 + $0x34] sm:$0xf] %v284
                  %v286 = vld [vmem:[%s256 + $0x70] sm:$0xf]
                  %287 = vst [vmem:[%s257 + $0x38] sm:$0xf] %v286
                  %v288 = vld [vmem:[%s256 + $0x78] sm:$0xf]
                  %289 = vst [vmem:[%s257 + $0x3c] sm:$0xf] %v288
                $region63: #{prediction_mlp.3} parent=50 // loop_footer
                  %s255 = sadd.s32 1, %s251
                $region64: #{prediction_mlp.3} parent=50 // loop_footer_branch
                  %250 = sbr.rel target = $region60
                $region65: #{prediction_mlp.3} parent=50 // loop_exit
                  _
              $region51: #{prediction_mlp.3} parent=35 // pred_fallthru
                _
            $region36: #{prediction_mlp.3} parent=31 // pred_fallthru
              _
            // Predicated region
            $region37: #{prediction_mlp.3} parent=31 // pred_check
              _
            $region38: #{prediction_mlp.3} parent=31 // pred_check_branch
              %197 = sbr.rel (0) target = $region40
            $region39: #{prediction_mlp.3} parent=31 // pred_region
              loop: start=0, step=1, limit=1
              $region41: #{prediction_mlp.3} parent=39 // loop_pre_header
                _
              $region42: #{prediction_mlp.3} parent=39 // loop_header
                %s200 = sphi 0, %s204
                %p201 = scmp.ge.s32.totalorder %s200, 1
                %s205 = sphi %s191, %s191
                %s206 = sphi %s189, %s189
              $region43: #{prediction_mlp.3} parent=39 // loop_header_branch
                %203 = sbr.rel (%p201) target = $region47
              $region44: #{prediction_mlp.3} parent=39 // loop_body
                %v207 = vld [vmem:[%s205] sm:$0xf]
                %208 = vst [vmem:[%s206] sm:$0xf] %v207
                %v209 = vld [vmem:[%s205 + $0x8] sm:$0xf]
                %210 = vst [vmem:[%s206 + $0x4] sm:$0xf] %v209
                %v211 = vld [vmem:[%s205 + $0x10] sm:$0xf]
                %212 = vst [vmem:[%s206 + $0x8] sm:$0xf] %v211
                %v213 = vld [vmem:[%s205 + $0x18] sm:$0xf]
                %214 = vst [vmem:[%s206 + $0xc] sm:$0xf] %v213
                %v215 = vld [vmem:[%s205 + $0x20] sm:$0xf]
                %216 = vst [vmem:[%s206 + $0x10] sm:$0xf] %v215
                %v217 = vld [vmem:[%s205 + $0x28] sm:$0xf]
                %218 = vst [vmem:[%s206 + $0x14] sm:$0xf] %v217
                %v219 = vld [vmem:[%s205 + $0x30] sm:$0xf]
                %220 = vst [vmem:[%s206 + $0x18] sm:$0xf] %v219
                %v221 = vld [vmem:[%s205 + $0x38] sm:$0xf]
                %222 = vst [vmem:[%s206 + $0x1c] sm:$0xf] %v221
                %v223 = vld [vmem:[%s205 + $0x40] sm:$0xf]
                %224 = vst [vmem:[%s206 + $0x20] sm:$0xf] %v223
                %v225 = vld [vmem:[%s205 + $0x48] sm:$0xf]
                %226 = vst [vmem:[%s206 + $0x24] sm:$0xf] %v225
                %v227 = vld [vmem:[%s205 + $0x50] sm:$0xf]
                %228 = vst [vmem:[%s206 + $0x28] sm:$0xf] %v227
                %v229 = vld [vmem:[%s205 + $0x58] sm:$0xf]
                %230 = vst [vmem:[%s206 + $0x2c] sm:$0xf] %v229
                %v231 = vld [vmem:[%s205 + $0x60] sm:$0xf]
                %232 = vst [vmem:[%s206 + $0x30] sm:$0xf] %v231
                %v233 = vld [vmem:[%s205 + $0x68] sm:$0xf]
                %234 = vst [vmem:[%s206 + $0x34] sm:$0xf] %v233
                %v235 = vld [vmem:[%s205 + $0x70] sm:$0xf]
                %236 = vst [vmem:[%s206 + $0x38] sm:$0xf] %v235
                %v237 = vld [vmem:[%s205 + $0x78] sm:$0xf]
                %238 = vst [vmem:[%s206 + $0x3c] sm:$0xf] %v237
              $region45: #{prediction_mlp.3} parent=39 // loop_footer
                %s204 = sadd.s32 1, %s200
              $region46: #{prediction_mlp.3} parent=39 // loop_footer_branch
                %199 = sbr.rel target = $region42
              $region47: #{prediction_mlp.3} parent=39 // loop_exit
                _
            $region40: #{prediction_mlp.3} parent=31 // pred_fallthru
              _
          $region32: #{prediction_mlp.3} parent=27 // pred_fallthru
            _
          %290 = vnop
        $region28: #{prediction_mlp.3} parent=19 // pred_fallthru
          _
        // Predicated region
        $region66: #{prediction_mlp.3} parent=19 // pred_check
          %p291 = pneg %p118
        $region67: #{prediction_mlp.3} parent=19 // pred_check_branch
          %293 = sbr.rel (%p291) target = $region69
        $region68: #{prediction_mlp.3} parent=19 // pred_region
          %p294 = scmp.lt.s32.totalorder %s21, 1
          %s295 = scalar_select %p294, %s21, 1
          %s296 = scalar_lea.vmem %s3, %s295
        $region69: #{prediction_mlp.3} parent=19 // pred_fallthru
          _
      $region20: #{prediction_mlp.3} parent=5 // pred_fallthru
        _
      %p297 = scmp.le.s32.totalorder 1, %s13
      %p298 = scmp.lt.s32.totalorder %s13, 5
      %p299 = pnand %p297, %p298
      %p300 = pneg %p299
      // Predicated region
      $region70: #{prediction_mlp.3} parent=5 // pred_check
        _
      $region71: #{prediction_mlp.3} parent=5 // pred_check_branch
        %302 = sbr.rel (%p299) target = $region73
      $region72: #{prediction_mlp.3} parent=5 // pred_region
        %s303 = ssub.s32 %s13, 1
        %s304 = sand.u32 %s85, 1
        %s305 = sand.u32 %s85, 1
        %s306 = smul.addr %s305, 64
        %s307 = scalar_lea.vmem [#allocation2], %s306
        // Predicated region
        $region74: #{prediction_mlp.3} parent=72 // pred_check
          %p308 = pneg %p98
        $region75: #{prediction_mlp.3} parent=72 // pred_check_branch
          %310 = sbr.rel (%p308) target = $region77
        $region76: #{prediction_mlp.3} parent=72 // pred_region
          _
        $region77: #{prediction_mlp.3} parent=72 // pred_fallthru
          _
        %s311 = smul.u32 4, %s22
        %p312 = scmp.lt.s32.totalorder %s311, 7
        %s313 = scalar_select %p312, %s311, 7
        %s314 = smul.addr %s313, 8
        %s315 = scalar_lea.vmem %s0, %s314
        %p316 = pneg %p51
        %p317 = pneg %p48
        %p318 = pneg %p72
        %p319 = pneg %p69
        %s320 = sand.u32 %s85, 1
        %s321 = sand.u32 %s85, 1
        %s322 = smul.addr %s321, 64
        %s323 = scalar_lea.vmem [#allocation2], %s322
        %p324 = pneg %p98
        %p325 = pneg %p95
        %p326 = scmp.lt.s32.totalorder %s23, 1
        %s327 = scalar_select %p326, %s23, 1
        %s328 = scalar_lea.vmem %s3, %s327
        %p329 = pneg %p124
        %p330 = pneg %p121
        %p331 = pneg %p152
        %p332 = pneg %p149
        %s333 = sand.u32 %s139, 1
        %s334 = scalar_lea.sflag [#allocation4], %s333
        %s335 = sand.u32 %s139, 1
        %s336 = smul.addr %s335, 32
        %s337 = scalar_lea.vmem [#allocation3], %s336
        %s338 = smul.u32 4, %s22
        %p339 = scmp.lt.s32.totalorder %s338, 7
        %s340 = scalar_select %p339, %s338, 7
        %s341 = smul.addr %s340, 8
        %s342 = scalar_lea.vmem %s0, %s341
        %s343 = smul.u32 4, %s22
        %p344 = scmp.lt.s32.totalorder %s23, 1
        %s345 = scalar_select %p344, %s23, 1
        %s346 = scalar_lea.vmem %s3, %s345
        %s347 = smul.u32 4, %s22
        %v349 = vld [vmem:[%s1] sm:$0x1]
        %v350 = vld [vmem:[%s1 + $0x1] sm:$0x1]
        %v351 = vld [vmem:[%s342] sm:$0xff]
        %v352 = vld [vmem:[%s342 + $0x8] sm:$0xff]
        %v353 = vld [vmem:[%s342 + $0x10] sm:$0xff]
        %v354 = vld [vmem:[%s342 + $0x18] sm:$0xff]
        %v355 = vlaneseq
        %v356 = vshrl.u32 %v355, 7
        %v357 = vsub.s32 0, %v356
        %v358 = vrot.slane %v349, %v357
        %v359 = vmul.f32 %v351, %v358
        %v360 = vmul.f32 %v352, %v358
        %v361 = vmul.f32 %v353, %v358
        %v362 = vmul.f32 %v354, %v358
        %v363 = vlaneseq
        %v364 = vshrl.u32 %v363, 7
        %v365 = vsub.s32 0, %v364
        %v366 = vrot.slane %v350, %v365
        %v367 = vadd.f32 %v359, %v366
        %v368 = vadd.f32 %v360, %v366
        %v369 = vadd.f32 %v361, %v366
        %v370 = vadd.f32 %v362, %v366
        %v371 = vmax.f32 %v367, 0.0
        %v372 = vmax.f32 %v368, 0.0
        %v373 = vmax.f32 %v369, 0.0
        %v374 = vmax.f32 %v370, 0.0
        %v375 = vpack.c.bf16 %v372, %v371
        %v376 = vpack.c.bf16 %v374, %v373
        %v377 = vld [vmem:[%s307] sm:$0xf]
        %v378 = vld [vmem:[%s307 + $0x4] sm:$0xf]
        %v379 = vld [vmem:[%s307 + $0x8] sm:$0xf]
        %v380 = vld [vmem:[%s307 + $0xc] sm:$0xf]
        %v381 = vld [vmem:[%s307 + $0x10] sm:$0xf]
        %v382 = vld [vmem:[%s307 + $0x14] sm:$0xf]
        %v383 = vld [vmem:[%s307 + $0x18] sm:$0xf]
        %v384 = vld [vmem:[%s307 + $0x1c] sm:$0xf]
        %v385 = vld [vmem:[%s307 + $0x20] sm:$0xf]
        %v386 = vld [vmem:[%s307 + $0x24] sm:$0xf]
        %v387 = vld [vmem:[%s307 + $0x28] sm:$0xf]
        %v388 = vld [vmem:[%s307 + $0x2c] sm:$0xf]
        %v389 = vld [vmem:[%s307 + $0x30] sm:$0xf]
        %v390 = vld [vmem:[%s307 + $0x34] sm:$0xf]
        %v391 = vld [vmem:[%s307 + $0x38] sm:$0xf]
        %v392 = vld [vmem:[%s307 + $0x3c] sm:$0xf]
        %v393 = vld [vmem:[%s346] sm:$0x1]
        %v395 = vlaneseq
        %v396 = vshrl.u32 %v395, 7
        %v397 = vsub.s32 0, %v396
        %v398 = vrot.slane %v393, %v397
        %v416 = vunpack.c.l.b16 %v377
        %v417 = vunpack.c.l.b16 %v378
        %v418 = vunpack.c.l.b16 %v379
        %v419 = vunpack.c.l.b16 %v380
        %v420 = vunpack.c.l.b16 %v381
        %v421 = vunpack.c.l.b16 %v382
        %v422 = vunpack.c.l.b16 %v383
        %v423 = vunpack.c.l.b16 %v384
        %v424 = vunpack.c.l.b16 %v385
        %v425 = vunpack.c.l.b16 %v386
        %v426 = vunpack.c.l.b16 %v387
        %v427 = vunpack.c.l.b16 %v388
        %v428 = vunpack.c.l.b16 %v389
        %v429 = vunpack.c.l.b16 %v390
        %v430 = vunpack.c.l.b16 %v391
        %v431 = vunpack.c.l.b16 %v392
        %v432 = vpack.c.b16 %v417, %v416
        %v433 = vpack.c.b16 %v419, %v418
        %v434 = vpack.c.b16 %v421, %v420
        %v435 = vpack.c.b16 %v423, %v422
        %v436 = vpack.c.b16 %v425, %v424
        %v437 = vpack.c.b16 %v427, %v426
        %v438 = vpack.c.b16 %v429, %v428
        %v439 = vpack.c.b16 %v431, %v430
        %448 = vmatprep.subr.bf16.mxu0 0
        %449 = vmatpush1.bf16.msra.mxu0 %v432
        %450 = vmatprep.subr.bf16.mxu0 0
        %451 = vmatpush1.bf16.msra.mxu0 %v433
        %452 = vmatprep.subr.bf16.mxu0 0
        %453 = vmatpush1.bf16.msra.mxu0 %v434
        %454 = vmatprep.subr.bf16.mxu0 0
        %455 = vmatpush1.bf16.msra.mxu0 %v435
        %456 = vmatprep.subr.bf16.mxu0 0
        %457 = vmatpush1.bf16.msra.mxu0 %v436
        %458 = vmatprep.subr.bf16.mxu0 0
        %459 = vmatpush1.bf16.msra.mxu0 %v437
        %460 = vmatprep.subr.bf16.mxu0 0
        %461 = vmatpush1.bf16.msra.mxu0 %v438
        %462 = vmatprep.subr.bf16.mxu0 0
        %463 = vmatpush1.bf16.msra.mxu0 %v439
        %464 = vmatprep.subr.bf16.mxu0 0
        %465 = vmatpush1.bf16.msra.mxu0 0
        %466 = vmatprep.subr.bf16.mxu0 0
        %467 = vmatpush1.bf16.msra.mxu0 0
        %468 = vmatprep.subr.bf16.mxu0 0
        %469 = vmatpush1.bf16.msra.mxu0 0
        %470 = vmatprep.subr.bf16.mxu0 0
        %471 = vmatpush1.bf16.msra.mxu0 0
        %472 = vmatprep.subr.bf16.mxu0 0
        %473 = vmatpush1.bf16.msra.mxu0 0
        %474 = vmatprep.subr.bf16.mxu0 0
        %475 = vmatpush1.bf16.msra.mxu0 0
        %476 = vmatprep.subr.bf16.mxu0 0
        %477 = vmatpush1.bf16.msra.mxu0 0
        %478 = vmatprep.subr.bf16.mxu0 0
        %479 = vmatpush1.bf16.msra.mxu0 0
        %480 = vmatprep.mubr.bf16.mxu0 0
        %481 = vmatmul.mubr.bf16.gmra.mrb[0].mxu0 %v375
        %v482 = vpop.f32.mrb[0].mxu0
        %v483 = vadd.f32 %v398, %v482
        %v484 = vpop.f32.mrb[0].mxu0
        %v485 = vpop.f32.mrb[0].mxu0
        %v486 = vadd.f32 %v398, %v485
        %v487 = vpop.f32.mrb[0].mxu0
        %488 = vmatprep.mubr.bf16.mxu0 0
        %489 = vmatmul.mubr.bf16.gmra.mrb[0].mxu0 %v376
        %v490 = vpop.f32.mrb[0].mxu0
        %v491 = vadd.f32 %v398, %v490
        %v492 = vpop.f32.mrb[0].mxu0
        %v493 = vpop.f32.mrb[0].mxu0
        %v494 = vadd.f32 %v398, %v493
        %v495 = vpop.f32.mrb[0].mxu0
        %496 = vdwg.mxu0
        %497 = vst [vmem:[%s337] sm:$0xff] %v483
        %498 = vst [vmem:[%s337 + $0x8] sm:$0xff] %v486
        %499 = vst [vmem:[%s337 + $0x10] sm:$0xff] %v491
        %500 = vst [vmem:[%s337 + $0x18] sm:$0xff] %v494
        %s501 = sand.u32 %s139, 1
        %s502 = scalar_lea.sflag [#allocation4], %s501
        %s503 = sand.u32 %s139, 1
        %s504 = smul.addr %s503, 32
        %s505 = scalar_lea.vmem [#allocation3], %s504
        // Predicated region
        $region78: #{prediction_mlp.3} parent=72 // pred_check
          %p506 = pneg %p149
        $region79: #{prediction_mlp.3} parent=72 // pred_check_branch
          %508 = sbr.rel (%p506) target = $region81
        $region80: #{prediction_mlp.3} parent=72 // pred_region
          %s509 = smul.u32 4, %s22
          %s511 = ssub.s32 512, 512
          %512 = vsyncadd %s502, %s511
          %s513 = smul.addr %s509, 2
          %s514 = sadd.s32 %s23, %s513
          %s515 = smul.addr %s514, 128
          %s516 = scalar_lea.hbm %s4, %s515
          %s517 = sshll.u32 %s505, 4
          %s518 = int_to_ptr.vmem [resolvable:$true] %s517
          %523 = dma.vmem_to_hbm [thread:$0]  %s518, 512, %s516, %s502, 128, 256, 8
        $region81: #{prediction_mlp.3} parent=72 // pred_fallthru
          _
      $region73: #{prediction_mlp.3} parent=5 // pred_fallthru
        _
      %p524 = scmp.le.s32.totalorder 2, %s13
      // Predicated region
      $region82: #{prediction_mlp.3} parent=5 // pred_check
        %p525 = pneg %p524
      $region83: #{prediction_mlp.3} parent=5 // pred_check_branch
        %527 = sbr.rel (%p525) target = $region85
      $region84: #{prediction_mlp.3} parent=5 // pred_region
        %s528 = ssub.s32 %s13, 2
        // Predicated region
        $region86: #{prediction_mlp.3} parent=84 // pred_check
          %p529 = pneg %p155
        $region87: #{prediction_mlp.3} parent=84 // pred_check_branch
          %531 = sbr.rel (%p529) target = $region89
        $region88: #{prediction_mlp.3} parent=84 // pred_region
          %s532 = sand.u32 %s140, 1
          %s533 = scalar_lea.sflag [#allocation4], %s532
          %s534 = sand.u32 %s140, 1
          %s535 = smul.addr %s534, 32
          %s536 = scalar_lea.vmem [#allocation3], %s535
          %537 = dma.done %s533, 512
        $region89: #{prediction_mlp.3} parent=84 // pred_fallthru
          _
      $region85: #{prediction_mlp.3} parent=5 // pred_fallthru
        _
    $region6: #{prediction_mlp.3} parent=1 // loop_footer
      %s17 = sadd.s32 1, %s13
    $region7: #{prediction_mlp.3} parent=1 // loop_footer_branch
      %12 = sbr.rel target = $region3
    $region8: #{prediction_mlp.3} parent=1 // loop_exit
      _
    %538 = vsyncpa [#allocation4], 1
    %s539 = scalar_lea.sflag [#allocation4], 1
    %540 = vsyncpa %s539, 1

</llo_original>
